<compile_context>
chip_gen: v7x
topology: tpu7x:2x2x1
jax: 0.10.0
libtpu: 0.0.40
codegen_flags: <defaults>
</compile_context>

<pallas_src>
import jax
import jax.numpy as jnp
from jax.experimental import pallas as pl
from jax.experimental.pallas import tpu as pltpu


def _round_up(x, m):
    return ((x + m - 1) // m) * m


def squash_linear_kernel(t_ref, x_ref, w_ref, b_ref, wh_ref, bh_ref, o_ref, acc_ref):
    k = pl.program_id(2)

    @pl.when(k == 0)
    def _init():
        acc_ref[...] = jnp.zeros_like(acc_ref)

    # Pure MXU accumulate along the K axis.
    acc_ref[...] += jnp.dot(x_ref[...], w_ref[...],
                            preferred_element_type=jnp.float32)

    @pl.when(k == pl.num_programs(2) - 1)
    def _finalize():
        # gate = sigmoid(t * w_hyper + b_hyper), computed once per output tile.
        t = t_ref[0, 0]
        gate = jax.nn.sigmoid(
            t * wh_ref[...].astype(jnp.float32) + bh_ref[...].astype(jnp.float32))
        y = acc_ref[...] + b_ref[...].astype(jnp.float32)
        o_ref[...] = (y * gate).astype(o_ref.dtype)


def squash_linear(t, x, w, b, wh, bh, *, tm=256, tn=256, tk=512):
    """t: (1,1) f32 scalar time; x: (B, dim_in); w: (dim_in, dim_out) (pre-transposed
    torch weight); b, wh, bh: (1, dim_out). Returns (B, dim_out)."""
    B, dim_in = x.shape
    dim_out = w.shape[1]

    # Adapt tiles to small problems while keeping sublane/lane alignment
    # (second-to-last dims multiples of 8, last dims multiples of 128).
    tm = min(tm, _round_up(B, 8))
    tn = min(tn, _round_up(dim_out, 128))
    tk = min(tk, _round_up(dim_in, 128))

    M = _round_up(B, tm)
    K = _round_up(dim_in, tk)
    N = _round_up(dim_out, tn)

    # Zero-pad to tile multiples: extra K rows/cols contribute 0 to the matmul;
    # extra M rows / N cols are sliced off below.
    if (M, K) != (B, dim_in):
        x = jnp.pad(x, ((0, M - B), (0, K - dim_in)))
    if (K, N) != (dim_in, dim_out):
        w = jnp.pad(w, ((0, K - dim_in), (0, N - dim_out)))
    if N != dim_out:
        b = jnp.pad(b, ((0, 0), (0, N - dim_out)))
        wh = jnp.pad(wh, ((0, 0), (0, N - dim_out)))
        bh = jnp.pad(bh, ((0, 0), (0, N - dim_out)))

    grid = (M // tm, N // tn, K // tk)

    out = pl.pallas_call(
        squash_linear_kernel,
        out_shape=jax.ShapeDtypeStruct((M, N), x.dtype),
        grid_spec=pltpu.PrefetchScalarGridSpec(
            num_scalar_prefetch=0,
            grid=grid,
            in_specs=[
                # scalar time -> SMEM (no VMEM DMA / vector load for a scalar)
                pl.BlockSpec(memory_space=pltpu.MemorySpace.SMEM),
                # x tile streams along K
                pl.BlockSpec((tm, tk), lambda i, j, k: (i, k)),
                # W tile streams along K (dominant DMA stream)
                pl.BlockSpec((tk, tn), lambda i, j, k: (k, j)),
                # bias / hyper weight / hyper bias: one (1, tn) column tile per N block
                pl.BlockSpec((1, tn), lambda i, j, k: (0, j)),
                pl.BlockSpec((1, tn), lambda i, j, k: (0, j)),
                pl.BlockSpec((1, tn), lambda i, j, k: (0, j)),
            ],
            out_specs=pl.BlockSpec((tm, tn), lambda i, j, k: (i, j)),
            scratch_shapes=[pltpu.VMEM((tm, tn), jnp.float32)],
        ),
        compiler_params=pltpu.CompilerParams(
            dimension_semantics=("parallel", "parallel", "arbitrary")),
    )(t, x, w, b, wh, bh)

    return out[:B, :dim_out]


def init_params(key, dim_in, dim_out):
    """Deterministic init mirroring torch.nn.Linear default (uniform +-1/sqrt(fan_in))."""
    k1, k2, k3, k4 = jax.random.split(key, 4)
    bound_layer = 1.0 / (dim_in ** 0.5)
    bound_hyper = 1.0  # fan_in = 1 for the hyper linear
    # layer: weight (dim_out, dim_in) in torch; store transposed (dim_in, dim_out)
    w = jax.random.uniform(k1, (dim_in, dim_out), jnp.float32,
                           -bound_layer, bound_layer)
    b = jax.random.uniform(k2, (1, dim_out), jnp.float32,
                           -bound_layer, bound_layer)
    # hyper: weight (dim_out, 1) in torch; store as row vector (1, dim_out)
    wh = jax.random.uniform(k3, (1, dim_out), jnp.float32,
                            -bound_hyper, bound_hyper)
    bh = jax.random.uniform(k4, (1, dim_out), jnp.float32,
                            -bound_hyper, bound_hyper)
    return w, b, wh, bh


if __name__ == "__main__":
    key = jax.random.PRNGKey(0)

    # Case 1: tiny shapes matching the module demo (single tile after padding).
    dim_in, dim_out, batch = 32, 32, 8
    kx, kt, kp, key = jax.random.split(key, 4)
    x = jax.random.normal(kx, (batch, dim_in), jnp.float32)
    t = jax.random.uniform(kt, (1, 1), jnp.float32)  # t.view(-1, 1) -> (1, 1)
    w, b, wh, bh = init_params(kp, dim_in, dim_out)

    out = jax.block_until_ready(squash_linear(t, x, w, b, wh, bh))
    ref = (x @ w + b) * jax.nn.sigmoid(t * wh + bh)
    assert out.shape == (batch, dim_out)
    assert jnp.allclose(out, ref, atol=1e-5, rtol=1e-5)

    # Case 2: unaligned shapes + multi-tile grid (exercises padding, K accumulation
    # across grid steps, and the k==last bias/gate finalize).
    dim_in2, dim_out2, batch2 = 300, 200, 40
    kx2, kt2, kp2 = jax.random.split(key, 3)
    x2 = jax.random.normal(kx2, (batch2, dim_in2), jnp.float32)
    t2 = jax.random.uniform(kt2, (1, 1), jnp.float32)
    w2, b2, wh2, bh2 = init_params(kp2, dim_in2, dim_out2)

    out2 = jax.block_until_ready(
        squash_linear(t2, x2, w2, b2, wh2, bh2, tm=16, tn=128, tk=128))
    ref2 = (jnp.dot(x2, w2, precision=jax.lax.Precision.HIGHEST) + b2) \
        * jax.nn.sigmoid(t2 * wh2 + bh2)
    assert out2.shape == (batch2, dim_out2)
    assert jnp.allclose(out2, ref2, atol=1e-3, rtol=1e-3)

    print("KERNEL_OK")
</pallas_src>

<mosaic_0001>
module attributes {stable_mosaic.version = 11 : i64} {
  func.func @squash_linear_kernel(%arg0: i32, %arg1: i32, %arg2: i32, %arg3: memref<1x1xf32, #tpu.memory_space<smem>>, %arg4: memref<8x128xf32, #tpu.memory_space<vmem>>, %arg5: memref<128x128xf32, #tpu.memory_space<vmem>>, %arg6: memref<1x128xf32, #tpu.memory_space<vmem>>, %arg7: memref<1x128xf32, #tpu.memory_space<vmem>>, %arg8: memref<1x128xf32, #tpu.memory_space<vmem>>, %arg9: memref<8x128xf32, #tpu.memory_space<vmem>>, %arg10: memref<8x128xf32, #tpu.memory_space<vmem>>) attributes {dimension_semantics = [#tpu.dimension_semantics<parallel>, #tpu.dimension_semantics<parallel>, #tpu.dimension_semantics<arbitrary>], iteration_bounds = array<i64: 1, 1, 1>, scalar_prefetch = 0 : i64, scratch_operands = 1 : i64, tpu.core_type = #tpu.core_type<tc>, window_params = [{transform_indices = @transform_0, window_bounds = array<i64: 1, 1>}, {transform_indices = @transform_1, window_bounds = array<i64: 8, 128>}, {transform_indices = @transform_2, window_bounds = array<i64: 128, 128>}, {transform_indices = @transform_3, window_bounds = array<i64: 1, 128>}, {transform_indices = @transform_4, window_bounds = array<i64: 1, 128>}, {transform_indices = @transform_5, window_bounds = array<i64: 1, 128>}, {transform_indices = @transform_6, window_bounds = array<i64: 8, 128>}]} {
    %c0_i32 = arith.constant 0 : i32
    %0 = arith.cmpi eq, %arg2, %c0_i32 : i32
    %1 = arith.extui %0 : i1 to i32
    %c0_i32_0 = arith.constant 0 : i32
    %2 = arith.cmpi ne, %1, %c0_i32_0 : i32
    scf.if %2 {
      %cst_10 = arith.constant 0.000000e+00 : f32
      %12 = vector.broadcast %cst_10 : f32 to vector<8x128xf32>
      %c0_11 = arith.constant 0 : index
      %c0_12 = arith.constant 0 : index
      %13 = vector.load %arg10[%c0_11, %c0_12] : memref<8x128xf32, #tpu.memory_space<vmem>>, vector<8x128xf32>
      tpu.vector_store %arg10[%c0_11, %c0_12], %12 {strides = array<i32>} : memref<8x128xf32, #tpu.memory_space<vmem>>, vector<8x128xf32>,
    } else {
    }
    %c0 = arith.constant 0 : index
    %c0_1 = arith.constant 0 : index
    %3 = vector.load %arg10[%c0, %c0_1] : memref<8x128xf32, #tpu.memory_space<vmem>>, vector<8x128xf32>
    %c0_2 = arith.constant 0 : index
    %c0_3 = arith.constant 0 : index
    %4 = vector.load %arg4[%c0_2, %c0_3] : memref<8x128xf32, #tpu.memory_space<vmem>>, vector<8x128xf32>
    %c0_4 = arith.constant 0 : index
    %c0_5 = arith.constant 0 : index
    %5 = vector.load %arg5[%c0_4, %c0_5] : memref<128x128xf32, #tpu.memory_space<vmem>>, vector<128x128xf32>
    %cst = arith.constant dense<0.000000e+00> : vector<8x128xf32>
    %6 = tpu.matmul %4, %5, %cst {dimension_numbers = #tpu.dot_dimension_numbers<[1], [0], [0], [1], [0, 0, 1, 1], [], []>} : vector<8x128xf32>, vector<128x128xf32>, vector<8x128xf32> -> vector<8x128xf32>
    %7 = arith.addf %3, %6 : vector<8x128xf32>
    %c0_6 = arith.constant 0 : index
    %c0_7 = arith.constant 0 : index
    %8 = vector.load %arg10[%c0_6, %c0_7] : memref<8x128xf32, #tpu.memory_space<vmem>>, vector<8x128xf32>
    tpu.vector_store %arg10[%c0_6, %c0_7], %7 {strides = array<i32>} : memref<8x128xf32, #tpu.memory_space<vmem>>, vector<8x128xf32>,
    %c0_i32_8 = arith.constant 0 : i32
    %9 = arith.cmpi eq, %arg2, %c0_i32_8 : i32
    %10 = arith.extui %9 : i1 to i32
    %c0_i32_9 = arith.constant 0 : i32
    %11 = arith.cmpi ne, %10, %c0_i32_9 : i32
    scf.if %11 {
      %c0_10 = arith.constant 0 : index
      %c0_11 = arith.constant 0 : index
      %12 = memref.load %arg3[%c0_10, %c0_11] : memref<1x1xf32, #tpu.memory_space<smem>>
      %c0_12 = arith.constant 0 : index
      %c0_13 = arith.constant 0 : index
      %13 = vector.load %arg7[%c0_12, %c0_13] : memref<1x128xf32, #tpu.memory_space<vmem>>, vector<1x128xf32>
      %14 = vector.broadcast %12 : f32 to vector<1x128xf32>
      %15 = arith.mulf %14, %13 : vector<1x128xf32>
      %c0_14 = arith.constant 0 : index
      %c0_15 = arith.constant 0 : index
      %16 = vector.load %arg8[%c0_14, %c0_15] : memref<1x128xf32, #tpu.memory_space<vmem>>, vector<1x128xf32>
      %17 = arith.addf %15, %16 : vector<1x128xf32>
      %18 = arith.negf %17 : vector<1x128xf32>
      %19 = math.exp %18 : vector<1x128xf32>
      %cst_16 = arith.constant 1.000000e+00 : f32
      %20 = vector.broadcast %cst_16 : f32 to vector<1x128xf32>
      %21 = arith.addf %20, %19 : vector<1x128xf32>
      %22 = arith.divf %20, %21 : vector<1x128xf32>
      %c0_17 = arith.constant 0 : index
      %c0_18 = arith.constant 0 : index
      %23 = vector.load %arg10[%c0_17, %c0_18] : memref<8x128xf32, #tpu.memory_space<vmem>>, vector<8x128xf32>
      %c0_19 = arith.constant 0 : index
      %c0_20 = arith.constant 0 : index
      %24 = vector.load %arg6[%c0_19, %c0_20] : memref<1x128xf32, #tpu.memory_space<vmem>>, vector<1x128xf32>
      %25 = vector.broadcast %24 : vector<1x128xf32> to vector<8x128xf32>
      %26 = arith.addf %23, %25 : vector<8x128xf32>
      %27 = vector.broadcast %22 : vector<1x128xf32> to vector<8x128xf32>
      %28 = arith.mulf %26, %27 : vector<8x128xf32>
      %c0_21 = arith.constant 0 : index
      %c0_22 = arith.constant 0 : index
      %29 = vector.load %arg9[%c0_21, %c0_22] : memref<8x128xf32, #tpu.memory_space<vmem>>, vector<8x128xf32>
      tpu.vector_store %arg9[%c0_21, %c0_22], %28 {strides = array<i32>} : memref<8x128xf32, #tpu.memory_space<vmem>>, vector<8x128xf32>,
    } else {
    }
    return
  }
  func.func @transform_0(%arg0: i32, %arg1: i32, %arg2: i32) -> (i32, i32) {
    %c0_i32 = arith.constant 0 : i32
    %c0_i32_0 = arith.constant 0 : i32
    %c0_i32_1 = arith.constant 0 : i32
    return %c0_i32, %c0_i32_0 : i32, i32
  }
  func.func @transform_1(%arg0: i32, %arg1: i32, %arg2: i32) -> (i32, i32) {
    %c0_i32 = arith.constant 0 : i32
    return %arg0, %arg2 : i32, i32
  }
  func.func @transform_2(%arg0: i32, %arg1: i32, %arg2: i32) -> (i32, i32) {
    %c0_i32 = arith.constant 0 : i32
    return %arg2, %arg1 : i32, i32
  }
  func.func @transform_3(%arg0: i32, %arg1: i32, %arg2: i32) -> (i32, i32) {
    %c0_i32 = arith.constant 0 : i32
    %c0_i32_0 = arith.constant 0 : i32
    return %c0_i32, %arg1 : i32, i32
  }
  func.func @transform_4(%arg0: i32, %arg1: i32, %arg2: i32) -> (i32, i32) {
    %c0_i32 = arith.constant 0 : i32
    %c0_i32_0 = arith.constant 0 : i32
    return %c0_i32, %arg1 : i32, i32
  }
  func.func @transform_5(%arg0: i32, %arg1: i32, %arg2: i32) -> (i32, i32) {
    %c0_i32 = arith.constant 0 : i32
    %c0_i32_0 = arith.constant 0 : i32
    return %c0_i32, %arg1 : i32, i32
  }
  func.func @transform_6(%arg0: i32, %arg1: i32, %arg2: i32) -> (i32, i32) {
    %c0_i32 = arith.constant 0 : i32
    return %arg0, %arg1 : i32, i32
  }
}

</mosaic_0001>

<llo_original>
// kernel: tpu_custom_call.1
$region0: #{tpu_custom_call.1}
  #allocation0 [shape = 'u32[]', space=smem, size = 0x4, offset = 0x4, fixed_abs, tag = 'smem constant byte address 0x4 - core index']
  #allocation1 [shape = 'u32[144,128]{1,0:T(1,128)}', space=vmem, size = 0x12000, scoped, tag = 'internal scratch']
  #allocation2 [shape = 'f32[8,128]{1,0:T(8,128)}', space=vmem, size = 0x1000, scoped, tag = 'scratch operand']
  #allocation3 [shape = 'f32[1,1]{1,0:T(1,128)S(6)}', space=smem, size = 0x200, scoped, tag = 'scoped memory for tpu_custom_call.1']
  %s0 = inlined_call_operand.<no memory space> [shape: f32[1,1], index: 0, kind: input, shape index: {}]
  %s1 = inlined_call_operand.hbm [shape: f32[8,128], index: 1, kind: input, shape index: {}]
  %s2 = inlined_call_operand.hbm [shape: f32[128,128], index: 2, kind: input, shape index: {}]
  %s3 = inlined_call_operand.vmem [shape: f32[1,128], index: 3, kind: input, shape index: {}]
  %s4 = inlined_call_operand.vmem [shape: f32[1,128], index: 4, kind: input, shape index: {}]
  %s5 = inlined_call_operand.vmem [shape: f32[1,128], index: 5, kind: input, shape index: {}]
  %s6 = inlined_call_operand.hbm [shape: f32[8,128], index: 6, kind: output, shape index: {}]
  %s7 = sld [smem:[#allocation0]]
  $region50: #{tpu_custom_call.1} parent=0
    _
  %s9 = ssub.s32 1, %s7
  %s10 = scalar_select 0, %s9, %s7
  %11 = sst [smem:[#allocation3]] %s0
  $region1: #{tpu_custom_call.1} parent=0
    #allocation4 [shape = 'u8[4096]{0}', space=vmem, size = 0x1000, scoped, tag = 'input window, operand 1, single buffered']
    #allocation5 [shape = 's32[1]{0}', space=sflag, size = 0x4, scoped, tag = 'scoped memory for tpu_custom_call.1']
    #allocation6 [shape = 's32[1]{0}', space=sflag, size = 0x4, scoped, tag = 'scoped memory for tpu_custom_call.1']
    #allocation7 [shape = 'u8[65536]{0}', space=vmem, size = 0x10000, scoped, tag = 'input window, operand 2, single buffered']
    #allocation8 [shape = 's32[1]{0}', space=sflag, size = 0x4, scoped, tag = 'scoped memory for tpu_custom_call.1']
    #allocation9 [shape = 'u8[4096]{0}', space=vmem, size = 0x1000, scoped, tag = 'output window, operand 0, single buffered']
    %12 = vsyncpa [#allocation5], 0
    %13 = vsyncpa [#allocation8], 0
    %14 = vsyncpa [#allocation6], 0
    // Predicated region
    $region2: #{tpu_custom_call.1} parent=1 // pred_check
      _
    $region3: #{tpu_custom_call.1} parent=1 // pred_check_branch
      %16 = sbr.rel (0) target = $region5
    $region4: #{tpu_custom_call.1} parent=1 // pred_region
      _
    $region5: #{tpu_custom_call.1} parent=1 // pred_fallthru
      _
    // Predicated region
    $region6: #{tpu_custom_call.1} parent=1 // pred_check
      _
    $region7: #{tpu_custom_call.1} parent=1 // pred_check_branch
      %18 = sbr.rel (0) target = $region9
    $region8: #{tpu_custom_call.1} parent=1 // pred_region
      %s20 = ssub.s32 128, 128
      %21 = vsyncadd [#allocation5], %s20
      %s23 = sshll.u32 [#allocation4], 4
      %s24 = int_to_ptr.vmem [resolvable:$true] %s23
      %26 = dma.hbm_to_vmem [thread:$0]  %s1, 128, %s24, [#allocation5]
    $region9: #{tpu_custom_call.1} parent=1 // pred_fallthru
      _
    // Predicated region
    $region10: #{tpu_custom_call.1} parent=1 // pred_check
      _
    $region11: #{tpu_custom_call.1} parent=1 // pred_check_branch
      %28 = sbr.rel (0) target = $region13
    $region12: #{tpu_custom_call.1} parent=1 // pred_region
      %s30 = ssub.s32 2048, 2048
      %31 = vsyncadd [#allocation8], %s30
      %s32 = sshll.u32 [#allocation7], 4
      %s33 = int_to_ptr.vmem [resolvable:$true] %s32
      %38 = dma.hbm_to_vmem [thread:$0]  %s2, 2048, %s33, [#allocation8], 128, 128, 8
    $region13: #{tpu_custom_call.1} parent=1 // pred_fallthru
      _
    // Predicated region
    $region14: #{tpu_custom_call.1} parent=1 // pred_check
      _
    $region15: #{tpu_custom_call.1} parent=1 // pred_check_branch
      %40 = sbr.rel (0) target = $region17
    $region16: #{tpu_custom_call.1} parent=1 // pred_region
      _
    $region17: #{tpu_custom_call.1} parent=1 // pred_fallthru
      _
    // Predicated region
    $region18: #{tpu_custom_call.1} parent=1 // pred_check
      _
    $region19: #{tpu_custom_call.1} parent=1 // pred_check_branch
      %42 = sbr.rel (0) target = $region21
    $region20: #{tpu_custom_call.1} parent=1 // pred_region
      _
    $region21: #{tpu_custom_call.1} parent=1 // pred_fallthru
      _
    // Predicated region
    $region22: #{tpu_custom_call.1} parent=1 // pred_check
      _
    $region23: #{tpu_custom_call.1} parent=1 // pred_check_branch
      %44 = sbr.rel (0) target = $region25
    $region24: #{tpu_custom_call.1} parent=1 // pred_region
      _
    $region25: #{tpu_custom_call.1} parent=1 // pred_fallthru
      _
    // Predicated region
    $region26: #{tpu_custom_call.1} parent=1 // pred_check
      _
    $region27: #{tpu_custom_call.1} parent=1 // pred_check_branch
      %46 = sbr.rel (0) target = $region29
    $region28: #{tpu_custom_call.1} parent=1 // pred_region
      %47 = dma.done [#allocation5], 128
    $region29: #{tpu_custom_call.1} parent=1 // pred_fallthru
      _
    // Predicated region
    $region30: #{tpu_custom_call.1} parent=1 // pred_check
      _
    $region31: #{tpu_custom_call.1} parent=1 // pred_check_branch
      %49 = sbr.rel (0) target = $region33
    $region32: #{tpu_custom_call.1} parent=1 // pred_region
      %50 = dma.done [#allocation8], 2048
    $region33: #{tpu_custom_call.1} parent=1 // pred_fallthru
      _
    %p51 = scmp.eq.s32.totalorder 0, 0
    // Predicated region
    $region34: #{tpu_custom_call.1} parent=1 // pred_check
      %p52 = pneg %p51
    $region35: #{tpu_custom_call.1} parent=1 // pred_check_branch
      %54 = sbr.rel (%p52) target = $region37
    $region36: #{tpu_custom_call.1} parent=1 // pred_region
      %55 = vst [vmem:[#allocation2] sm:$0xff] 0.0
    $region37: #{tpu_custom_call.1} parent=1 // pred_fallthru
      _
    %v56 = vld [vmem:[#allocation2] sm:$0xff]
    %v57 = vld [vmem:[#allocation4] sm:$0xff]
    %v58 = vld [vmem:[#allocation7] sm:$0xff]
    %v59 = vld [vmem:[#allocation7 + $0x8] sm:$0xff]
    %v60 = vld [vmem:[#allocation7 + $0x10] sm:$0xff]
    %v61 = vld [vmem:[#allocation7 + $0x18] sm:$0xff]
    %v62 = vld [vmem:[#allocation7 + $0x20] sm:$0xff]
    %v63 = vld [vmem:[#allocation7 + $0x28] sm:$0xff]
    %v64 = vld [vmem:[#allocation7 + $0x30] sm:$0xff]
    %v65 = vld [vmem:[#allocation7 + $0x38] sm:$0xff]
    %v66 = vld [vmem:[#allocation7 + $0x40] sm:$0xff]
    %v67 = vld [vmem:[#allocation7 + $0x48] sm:$0xff]
    %v68 = vld [vmem:[#allocation7 + $0x50] sm:$0xff]
    %v69 = vld [vmem:[#allocation7 + $0x58] sm:$0xff]
    %v70 = vld [vmem:[#allocation7 + $0x60] sm:$0xff]
    %v71 = vld [vmem:[#allocation7 + $0x68] sm:$0xff]
    %v72 = vld [vmem:[#allocation7 + $0x70] sm:$0xff]
    %v73 = vld [vmem:[#allocation7 + $0x78] sm:$0xff]
    %74 = vmatprep.subr.mxu0 0.0
    %75 = vmatpush1.msra.mxu0 %v58
    %76 = vmatprep.subr.mxu0 0.0
    %77 = vmatpush1.msra.mxu0 %v59
    %78 = vmatprep.subr.mxu0 0.0
    %79 = vmatpush1.msra.mxu0 %v60
    %80 = vmatprep.subr.mxu0 0.0
    %81 = vmatpush1.msra.mxu0 %v61
    %82 = vmatprep.subr.mxu0 0.0
    %83 = vmatpush1.msra.mxu0 %v62
    %84 = vmatprep.subr.mxu0 0.0
    %85 = vmatpush1.msra.mxu0 %v63
    %86 = vmatprep.subr.mxu0 0.0
    %87 = vmatpush1.msra.mxu0 %v64
    %88 = vmatprep.subr.mxu0 0.0
    %89 = vmatpush1.msra.mxu0 %v65
    %90 = vmatprep.subr.mxu0 0.0
    %91 = vmatpush1.msra.mxu0 %v66
    %92 = vmatprep.subr.mxu0 0.0
    %93 = vmatpush1.msra.mxu0 %v67
    %94 = vmatprep.subr.mxu0 0.0
    %95 = vmatpush1.msra.mxu0 %v68
    %96 = vmatprep.subr.mxu0 0.0
    %97 = vmatpush1.msra.mxu0 %v69
    %98 = vmatprep.subr.mxu0 0.0
    %99 = vmatpush1.msra.mxu0 %v70
    %100 = vmatprep.subr.mxu0 0.0
    %101 = vmatpush1.msra.mxu0 %v71
    %102 = vmatprep.subr.mxu0 0.0
    %103 = vmatpush1.msra.mxu0 %v72
    %104 = vmatprep.subr.mxu0 0.0
    %105 = vmatpush1.msra.mxu0 %v73
    %106 = vmatprep.subr.mxu0 0.0
    %107 = vmatpush1.msra.mxu0 0.0
    %108 = vmatprep.subr.mxu0 0.0
    %109 = vmatpush1.msra.mxu0 0.0
    %110 = vmatprep.subr.mxu0 0.0
    %111 = vmatpush1.msra.mxu0 0.0
    %112 = vmatprep.subr.mxu0 0.0
    %113 = vmatpush1.msra.mxu0 0.0
    %114 = vmatprep.subr.mxu0 0.0
    %115 = vmatpush1.msra.mxu0 0.0
    %116 = vmatprep.subr.mxu0 0.0
    %117 = vmatpush1.msra.mxu0 0.0
    %118 = vmatprep.subr.mxu0 0.0
    %119 = vmatpush1.msra.mxu0 0.0
    %120 = vmatprep.subr.mxu0 0.0
    %121 = vmatpush1.msra.mxu0 0.0
    %122 = vmatprep.subr.mxu0 0.0
    %123 = vmatpush1.msra.mxu0 0.0
    %124 = vmatprep.subr.mxu0 0.0
    %125 = vmatpush1.msra.mxu0 0.0
    %126 = vmatprep.subr.mxu0 0.0
    %127 = vmatpush1.msra.mxu0 0.0
    %128 = vmatprep.subr.mxu0 0.0
    %129 = vmatpush1.msra.mxu0 0.0
    %130 = vmatprep.subr.mxu0 0.0
    %131 = vmatpush1.msra.mxu0 0.0
    %132 = vmatprep.subr.mxu0 0.0
    %133 = vmatpush1.msra.mxu0 0.0
    %134 = vmatprep.subr.mxu0 0.0
    %135 = vmatpush1.msra.mxu0 0.0
    %136 = vmatprep.subr.mxu0 0.0
    %137 = vmatpush1.msra.mxu0 0.0
    %138 = vmatprep.mubr.f32.mxu0 0.0
    %139 = vmatmul.mubr.f32.gmra.mrb[0].mxu0 %v57
    %v140 = vpop.f32.mrb[0].mxu0
    %v141 = vadd.f32 0.0, %v140
    %v142 = vpop.f32.mrb[0].mxu0
    %143 = vdwg.mxu0
    %v144 = vadd.f32 %v56, %v141
    %145 = vst [vmem:[#allocation2] sm:$0xff] %v144
    // Predicated region
    $region38: #{tpu_custom_call.1} parent=1 // pred_check
      %p146 = pneg %p51
    $region39: #{tpu_custom_call.1} parent=1 // pred_check_branch
      %148 = sbr.rel (%p146) target = $region41
    $region40: #{tpu_custom_call.1} parent=1 // pred_region
      %s149 = sld [smem:[#allocation3]]
      %v150 = vld [vmem:[%s4] sm:$0x1]
      %v151 = vstv %s149
      %v152 = vmul.f32 %v151, %v150
      %v153 = vld [vmem:[%s5] sm:$0x1]
      %v154 = vadd.f32 %v152, %v153
      %v155 = vxor.u32 %v154, 2147483648
      %v156 = vmul.f32 %v155, 1.442695
      %v157 = vpow.pop %v156
      %v158 = vadd.f32 %v157, 1.0
      %v159 = vrcp.pop %v158
      %v160 = vmul.f32 1.0, %v159
      %v161 = vld [vmem:[#allocation2] sm:$0xff]
      %v162 = vld [vmem:[%s3] sm:$0x1]
      %v164 = vlaneseq
      %v165 = vshrl.u32 %v164, 7
      %v166 = vsub.s32 0, %v165
      %v167 = vrot.slane %v162, %v166
      %v169 = vadd.f32 %v161, %v167
      %v171 = vlaneseq
      %v172 = vshrl.u32 %v171, 7
      %v173 = vsub.s32 0, %v172
      %v174 = vrot.slane %v160, %v173
      %v176 = vmul.f32 %v169, %v174
      %177 = vst [vmem:[#allocation9] sm:$0xff] %v176
    $region41: #{tpu_custom_call.1} parent=1 // pred_fallthru
      _
    // Predicated region
    $region42: #{tpu_custom_call.1} parent=1 // pred_check
      _
    $region43: #{tpu_custom_call.1} parent=1 // pred_check_branch
      %179 = sbr.rel (0) target = $region45
    $region44: #{tpu_custom_call.1} parent=1 // pred_region
      %s181 = ssub.s32 128, 128
      %182 = vsyncadd [#allocation6], %s181
      %s184 = sshll.u32 [#allocation9], 4
      %s185 = int_to_ptr.vmem [resolvable:$true] %s184
      %187 = dma.vmem_to_hbm [thread:$0]  %s185, 128, %s6, [#allocation6]
    $region45: #{tpu_custom_call.1} parent=1 // pred_fallthru
      _
    // Predicated region
    $region46: #{tpu_custom_call.1} parent=1 // pred_check
      _
    $region47: #{tpu_custom_call.1} parent=1 // pred_check_branch
      %189 = sbr.rel (0) target = $region49
    $region48: #{tpu_custom_call.1} parent=1 // pred_region
      %190 = dma.done [#allocation6], 128
    $region49: #{tpu_custom_call.1} parent=1 // pred_fallthru
      _
    %191 = vsyncpa [#allocation5], 1
    %192 = vsyncpa [#allocation8], 1
    %193 = vsyncpa [#allocation6], 1

</llo_original>
